<compile_context>
chip_gen: v7x
topology: tpu7x:2x2x1
jax: 0.10.0
libtpu: 0.0.40
codegen_flags: <defaults>
</compile_context>

<pallas_src>
import jax
import jax.numpy as jnp
from jax.experimental import pallas as pl
from jax.experimental.pallas import tpu as pltpu

INPUT_DIM = 391
HIDDEN_DIM = 32
OUT_DIM = 1

# Rows per batch tile (multiple of 8).  x tile = 4096 x 512(lane-pad) f32 =
# 8 MiB; double-buffered + resident weights + lane-dense output slab ~= 21 MiB
# of scoped VMEM, safe on every generation (v7x has 64 MiB physical VMEM).
TM_MAX = 4096


def _round_up(v, m):
    return ((v + m - 1) // m) * m


def _mlp_kernel(x_ref, w1_ref, b1_ref, w2_ref, b2_ref, w3t_ref, b3_ref, o_ref):
    # One batch tile: (TM, 391) -> (1, TM), all three layers fused.

    # Layer 1: Linear(391 -> 32) + ReLU.  bf16 operands -> single-pass MXU,
    # f32 accumulation.  (Dropout = identity in eval mode.)
    x = x_ref[...].astype(jnp.bfloat16)
    h1 = jnp.dot(x, w1_ref[...], preferred_element_type=jnp.float32) + b1_ref[...]
    h1 = jnp.maximum(h1, 0.0)

    # Layer 2: Linear(32 -> 32) + ReLU (tiny; keep f32).
    h2 = jnp.dot(h1, w2_ref[...], preferred_element_type=jnp.float32) + b2_ref[...]
    h2 = jnp.maximum(h2, 0.0)

    # Head: Linear(32 -> 1), emitted lane-dense as a (1, TM) row:
    #   out = w3^T (1,32) . h2^T   via NT dot_general (contract dim 1 of both
    # operands, same dimension_numbers as q @ k^T in flash attention).
    out_row = jax.lax.dot_general(
        w3t_ref[...], h2,
        dimension_numbers=(((1,), (1,)), ((), ())),
        preferred_element_type=jnp.float32,
    ) + b3_ref[...]
    o_ref[0] = out_row.astype(o_ref.dtype)        # o_ref block: (1, 1, TM)


def bcl_mlp_forward(x, params, *, tm=None):
    """x: anything that flattens to (-1, 391) (mirrors .view(-1, 391)).
    Returns (N, 1) float32."""
    w1, b1, w2, b2, w3, b3 = params
    x = x.reshape(-1, INPUT_DIM)
    n = x.shape[0]

    if tm is None:
        tm = TM_MAX
        # Keep >=2 grid steps when there is enough work so the "parallel"
        # batch axis can be sharded across both TensorCores on v7x.
        if n > 8:
            tm = min(tm, _round_up(pl.cdiv(n, 2), 8))
    tm = max(8, min(_round_up(tm, 8), _round_up(n, 8)))
    grid_m = pl.cdiv(n, tm)

    # Weights stored (in, out) so the kernel computes x @ W + b.  Layer-1
    # weights are pre-cast to bf16; w3 is passed transposed (1, 32) so the
    # head can emit a lane-dense (1, tm) row.
    w1_bf16 = w1.astype(jnp.bfloat16)
    w3t = w3.reshape(1, HIDDEN_DIM)

    def resident(shape):
        # Same block every grid step -> stays VMEM-resident.
        return pl.BlockSpec(shape, lambda i: (0, 0))

    # Explicit scoped-VMEM budget: double-buffered x tile + output row slab +
    # resident weights, plus headroom for compiler-internal scratch.
    lane = lambda d: _round_up(d, 128)
    sub = lambda d: _round_up(d, 8)
    x_tile_bytes = sub(tm) * lane(INPUT_DIM) * 4
    o_tile_bytes = sub(1) * lane(tm) * 4
    w_bytes = (sub(INPUT_DIM) * lane(HIDDEN_DIM) * 2        # w1 (bf16)
               + sub(HIDDEN_DIM) * lane(HIDDEN_DIM) * 4     # w2
               + 3 * sub(1) * lane(HIDDEN_DIM) * 4          # b1, b2, w3^T
               + sub(1) * lane(OUT_DIM) * 4)                # b3
    vmem_limit = 2 * (x_tile_bytes + o_tile_bytes + w_bytes) + (4 << 20)
    vmem_limit = max(int(vmem_limit), 16 << 20)

    out_slab = pl.pallas_call(
        _mlp_kernel,
        out_shape=jax.ShapeDtypeStruct((grid_m, 1, tm), jnp.float32),
        grid=(grid_m,),
        in_specs=[
            pl.BlockSpec((tm, INPUT_DIM), lambda i: (i, 0)),   # x: streamed tiles
            resident((INPUT_DIM, HIDDEN_DIM)),                 # w1 (bf16)
            resident((1, HIDDEN_DIM)),                         # b1
            resident((HIDDEN_DIM, HIDDEN_DIM)),                # w2
            resident((1, HIDDEN_DIM)),                         # b2
            resident((1, HIDDEN_DIM)),                         # w3^T
            resident((1, OUT_DIM)),                            # b3
        ],
        out_specs=pl.BlockSpec((1, 1, tm), lambda i: (i, 0, 0)),
        compiler_params=pltpu.CompilerParams(
            dimension_semantics=("parallel",),
            vmem_limit_bytes=vmem_limit,
        ),
    )(x, w1_bf16, b1, w2, b2, w3t, b3)

    # Lane-dense (grid_m, 1, tm) slab -> (N, 1); drop padded tail rows.
    return out_slab.reshape(grid_m * tm)[:n].reshape(n, OUT_DIM)


def init_params(key):
    """PyTorch default Linear init (uniform +/- 1/sqrt(fan_in)); weights (in, out)."""
    def linear(key, fan_in, fan_out):
        kw, kb = jax.random.split(key)
        bound = 1.0 / jnp.sqrt(float(fan_in))
        w = jax.random.uniform(kw, (fan_in, fan_out), jnp.float32, -bound, bound)
        b = jax.random.uniform(kb, (1, fan_out), jnp.float32, -bound, bound)
        return w, b

    k1, k2, k3 = jax.random.split(key, 3)
    w1, b1 = linear(k1, INPUT_DIM, HIDDEN_DIM)
    w2, b2 = linear(k2, HIDDEN_DIM, HIDDEN_DIM)
    w3, b3 = linear(k3, HIDDEN_DIM, OUT_DIM)
    return (w1, b1, w2, b2, w3, b3)


def reference_forward(x, params):
    # Full-precision f32 reference (original module semantics).
    w1, b1, w2, b2, w3, b3 = params
    hi = jax.lax.Precision.HIGHEST
    h1 = jnp.maximum(jnp.dot(x, w1, precision=hi) + b1, 0.0)
    h2 = jnp.maximum(jnp.dot(h1, w2, precision=hi) + b2, 0.0)
    return jnp.dot(h2, w3, precision=hi) + b3


if __name__ == "__main__":
    key = jax.random.PRNGKey(0)
    kx, kp, kx2 = jax.random.split(key, 3)
    params = init_params(kp)

    # Small batch (single tile): batch_data.bcl.view(-1, 391) with 8 rows.
    x = jax.random.normal(kx, (8, INPUT_DIM), jnp.float32)
    out = jax.block_until_ready(bcl_mlp_forward(x, params))
    ref = reference_forward(x, params)
    assert out.shape == (8, OUT_DIM)
    # Layer 1 runs with bf16 operands on the MXU, so ~1e-2 absolute deviation
    # from the f32 reference is expected.
    assert jnp.allclose(out, ref, atol=2e-2, rtol=2e-2), \
        float(jnp.max(jnp.abs(out - ref)))

    # Multi-tile path, N not a multiple of the tile: auto tm -> 24 rows,
    # 2 grid steps (megacore split) + a partial last tile.
    x2 = jax.random.normal(kx2, (37, INPUT_DIM), jnp.float32)
    out2 = jax.block_until_ready(bcl_mlp_forward(x2, params))
    ref2 = reference_forward(x2, params)
    assert out2.shape == (37, OUT_DIM)
    assert jnp.allclose(out2, ref2, atol=2e-2, rtol=2e-2), \
        float(jnp.max(jnp.abs(out2 - ref2)))

    # Forced tiny tile -> 5 grid steps; exercises output-slab block padding.
    out3 = jax.block_until_ready(bcl_mlp_forward(x2, params, tm=8))
    assert out3.shape == (37, OUT_DIM)
    assert jnp.allclose(out3, ref2, atol=2e-2, rtol=2e-2)

    print("KERNEL_OK")
</pallas_src>

<mosaic_0001>
module attributes {stable_mosaic.version = 11 : i64} {
  func.func @_mlp_kernel(%arg0: i32, %arg1: memref<8x391xf32, #tpu.memory_space<vmem>>, %arg2: memref<391x32xbf16, #tpu.memory_space<vmem>>, %arg3: memref<1x32xf32, #tpu.memory_space<vmem>>, %arg4: memref<32x32xf32, #tpu.memory_space<vmem>>, %arg5: memref<1x32xf32, #tpu.memory_space<vmem>>, %arg6: memref<1x32xf32, #tpu.memory_space<vmem>>, %arg7: memref<1x1xf32, #tpu.memory_space<vmem>>, %arg8: memref<1x1x8xf32, #tpu.memory_space<vmem>>) attributes {dimension_semantics = [#tpu.dimension_semantics<parallel>], iteration_bounds = array<i64: 1>, scalar_prefetch = 0 : i64, scratch_operands = 0 : i64, tpu.core_type = #tpu.core_type<tc>, window_params = [{transform_indices = @transform_0, window_bounds = array<i64: 8, 391>}, {pipeline_mode = #tpu.pipeline_mode<synchronous>, transform_indices = @transform_1, window_bounds = array<i64: 391, 32>}, {pipeline_mode = #tpu.pipeline_mode<synchronous>, transform_indices = @transform_2, window_bounds = array<i64: 1, 32>}, {pipeline_mode = #tpu.pipeline_mode<synchronous>, transform_indices = @transform_3, window_bounds = array<i64: 32, 32>}, {pipeline_mode = #tpu.pipeline_mode<synchronous>, transform_indices = @transform_4, window_bounds = array<i64: 1, 32>}, {pipeline_mode = #tpu.pipeline_mode<synchronous>, transform_indices = @transform_5, window_bounds = array<i64: 1, 32>}, {pipeline_mode = #tpu.pipeline_mode<synchronous>, transform_indices = @transform_6, window_bounds = array<i64: 1, 1>}, {transform_indices = @transform_7, window_bounds = array<i64: 1, 1, 8>}]} {
    %c0 = arith.constant 0 : index
    %c0_0 = arith.constant 0 : index
    %0 = vector.load %arg1[%c0, %c0_0] : memref<8x391xf32, #tpu.memory_space<vmem>>, vector<8x391xf32>
    %1 = arith.truncf %0 : vector<8x391xf32> to vector<8x391xbf16>
    %c0_1 = arith.constant 0 : index
    %c0_2 = arith.constant 0 : index
    %2 = vector.load %arg2[%c0_1, %c0_2] : memref<391x32xbf16, #tpu.memory_space<vmem>>, vector<391x32xbf16>
    %cst = arith.constant dense<0.000000e+00> : vector<8x32xf32>
    %3 = tpu.matmul %1, %2, %cst {dimension_numbers = #tpu.dot_dimension_numbers<[1], [0], [0], [1], [0, 0, 1, 1], [], []>} : vector<8x391xbf16>, vector<391x32xbf16>, vector<8x32xf32> -> vector<8x32xf32>
    %c0_3 = arith.constant 0 : index
    %c0_4 = arith.constant 0 : index
    %4 = vector.load %arg3[%c0_3, %c0_4] : memref<1x32xf32, #tpu.memory_space<vmem>>, vector<1x32xf32>
    %5 = vector.broadcast %4 : vector<1x32xf32> to vector<8x32xf32>
    %6 = arith.addf %3, %5 : vector<8x32xf32>
    %cst_5 = arith.constant 0.000000e+00 : f32
    %7 = vector.broadcast %cst_5 : f32 to vector<8x32xf32>
    %8 = arith.maximumf %6, %7 : vector<8x32xf32>
    %c0_6 = arith.constant 0 : index
    %c0_7 = arith.constant 0 : index
    %9 = vector.load %arg4[%c0_6, %c0_7] : memref<32x32xf32, #tpu.memory_space<vmem>>, vector<32x32xf32>
    %cst_8 = arith.constant dense<0.000000e+00> : vector<8x32xf32>
    %10 = tpu.matmul %8, %9, %cst_8 {dimension_numbers = #tpu.dot_dimension_numbers<[1], [0], [0], [1], [0, 0, 1, 1], [], []>} : vector<8x32xf32>, vector<32x32xf32>, vector<8x32xf32> -> vector<8x32xf32>
    %c0_9 = arith.constant 0 : index
    %c0_10 = arith.constant 0 : index
    %11 = vector.load %arg5[%c0_9, %c0_10] : memref<1x32xf32, #tpu.memory_space<vmem>>, vector<1x32xf32>
    %12 = vector.broadcast %11 : vector<1x32xf32> to vector<8x32xf32>
    %13 = arith.addf %10, %12 : vector<8x32xf32>
    %cst_11 = arith.constant 0.000000e+00 : f32
    %14 = vector.broadcast %cst_11 : f32 to vector<8x32xf32>
    %15 = arith.maximumf %13, %14 : vector<8x32xf32>
    %c0_12 = arith.constant 0 : index
    %c0_13 = arith.constant 0 : index
    %16 = vector.load %arg6[%c0_12, %c0_13] : memref<1x32xf32, #tpu.memory_space<vmem>>, vector<1x32xf32>
    %cst_14 = arith.constant dense<0.000000e+00> : vector<1x8xf32>
    %17 = tpu.matmul %16, %15, %cst_14 {dimension_numbers = #tpu.dot_dimension_numbers<[1], [1], [0], [0], [0, 0, 1, 0], [], []>} : vector<1x32xf32>, vector<8x32xf32>, vector<1x8xf32> -> vector<1x8xf32>
    %c0_15 = arith.constant 0 : index
    %c0_16 = arith.constant 0 : index
    %18 = vector.load %arg7[%c0_15, %c0_16] : memref<1x1xf32, #tpu.memory_space<vmem>>, vector<1x1xf32>
    %19 = vector.broadcast %18 : vector<1x1xf32> to vector<1x8xf32>
    %20 = arith.addf %17, %19 : vector<1x8xf32>
    %c0_17 = arith.constant 0 : index
    %c0_18 = arith.constant 0 : index
    %c0_19 = arith.constant 0 : index
    %21 = vector.load %arg8[%c0_17, %c0_18, %c0_19] : memref<1x1x8xf32, #tpu.memory_space<vmem>>, vector<1x1x8xf32>
    %22 = vector.shape_cast %21 : vector<1x1x8xf32> to vector<1x8xf32>
    %23 = vector.shape_cast %20 : vector<1x8xf32> to vector<1x1x8xf32>
    tpu.vector_store %arg8[%c0_17, %c0_18, %c0_19], %23 {strides = array<i32>} : memref<1x1x8xf32, #tpu.memory_space<vmem>>, vector<1x1x8xf32>,
    return
  }
  func.func @transform_0(%arg0: i32) -> (i32, i32) {
    %c0_i32 = arith.constant 0 : i32
    %c0_i32_0 = arith.constant 0 : i32
    return %arg0, %c0_i32 : i32, i32
  }
  func.func @transform_1(%arg0: i32) -> (i32, i32) {
    %c0_i32 = arith.constant 0 : i32
    %c0_i32_0 = arith.constant 0 : i32
    %c0_i32_1 = arith.constant 0 : i32
    return %c0_i32, %c0_i32_0 : i32, i32
  }
  func.func @transform_2(%arg0: i32) -> (i32, i32) {
    %c0_i32 = arith.constant 0 : i32
    %c0_i32_0 = arith.constant 0 : i32
    %c0_i32_1 = arith.constant 0 : i32
    return %c0_i32, %c0_i32_0 : i32, i32
  }
  func.func @transform_3(%arg0: i32) -> (i32, i32) {
    %c0_i32 = arith.constant 0 : i32
    %c0_i32_0 = arith.constant 0 : i32
    %c0_i32_1 = arith.constant 0 : i32
    return %c0_i32, %c0_i32_0 : i32, i32
  }
  func.func @transform_4(%arg0: i32) -> (i32, i32) {
    %c0_i32 = arith.constant 0 : i32
    %c0_i32_0 = arith.constant 0 : i32
    %c0_i32_1 = arith.constant 0 : i32
    return %c0_i32, %c0_i32_0 : i32, i32
  }
  func.func @transform_5(%arg0: i32) -> (i32, i32) {
    %c0_i32 = arith.constant 0 : i32
    %c0_i32_0 = arith.constant 0 : i32
    %c0_i32_1 = arith.constant 0 : i32
    return %c0_i32, %c0_i32_0 : i32, i32
  }
  func.func @transform_6(%arg0: i32) -> (i32, i32) {
    %c0_i32 = arith.constant 0 : i32
    %c0_i32_0 = arith.constant 0 : i32
    %c0_i32_1 = arith.constant 0 : i32
    return %c0_i32, %c0_i32_0 : i32, i32
  }
  func.func @transform_7(%arg0: i32) -> (i32, i32, i32) {
    %c0_i32 = arith.constant 0 : i32
    %c0_i32_0 = arith.constant 0 : i32
    %c0_i32_1 = arith.constant 0 : i32
    return %arg0, %c0_i32, %c0_i32_0 : i32, i32, i32
  }
}

</mosaic_0001>

<llo_original>
// kernel: tpu_custom_call.1
$region0: #{tpu_custom_call.1}
  #allocation0 [shape = 'u32[]', space=smem, size = 0x4, offset = 0x4, fixed_abs, tag = 'smem constant byte address 0x4 - core index']
  #allocation1 [shape = 'u32[144,128]{1,0:T(1,128)}', space=vmem, size = 0x12000, scoped, tag = 'internal scratch']
  #allocation2 [shape = 'f32[1,1]{1,0:T(1,128)S(1)}', space=vmem, size = 0x200, scoped, tag = 'scoped memory for tpu_custom_call.1']
  %s0 = inlined_call_operand.vmem [shape: f32[8,391], index: 0, kind: input, shape index: {}]
  %s1 = inlined_call_operand.vmem [shape: bf16[391,32], index: 1, kind: input, shape index: {}]
  %s2 = inlined_call_operand.vmem [shape: f32[1,32], index: 2, kind: input, shape index: {}]
  %s3 = inlined_call_operand.vmem [shape: f32[32,32], index: 3, kind: input, shape index: {}]
  %s4 = inlined_call_operand.vmem [shape: f32[1,32], index: 4, kind: input, shape index: {}]
  %s5 = inlined_call_operand.vmem [shape: f32[1,32], index: 5, kind: input, shape index: {}]
  %s6 = inlined_call_operand.<no memory space> [shape: f32[1,1], index: 6, kind: input, shape index: {}]
  %s7 = inlined_call_operand.hbm [shape: f32[1,1,8], index: 7, kind: output, shape index: {}]
  %s8 = sld [smem:[#allocation0]]
  $region38: #{tpu_custom_call.1} parent=0
    _
  %s10 = ssub.s32 1, %s8
  %s11 = scalar_select 0, %s10, %s8
  %v12 = vstv %s6
  %13 = vst [vmem:[#allocation2] sm:$0x1] %v12
  $region1: #{tpu_custom_call.1} parent=0
    #allocation3 [shape = 'u8[512]{0}', space=vmem, size = 0x400, scoped, tag = 'output window, operand 0, single buffered']
    #allocation4 [shape = 's32[1]{0}', space=sflag, size = 0x4, scoped, tag = 'scoped memory for tpu_custom_call.1']
    %14 = vsyncpa [#allocation4], 0
    // Predicated region
    $region2: #{tpu_custom_call.1} parent=1 // pred_check
      _
    $region3: #{tpu_custom_call.1} parent=1 // pred_check_branch
      %16 = sbr.rel (0) target = $region5
    $region4: #{tpu_custom_call.1} parent=1 // pred_region
      _
    $region5: #{tpu_custom_call.1} parent=1 // pred_fallthru
      _
    // Predicated region
    $region6: #{tpu_custom_call.1} parent=1 // pred_check
      _
    $region7: #{tpu_custom_call.1} parent=1 // pred_check_branch
      %18 = sbr.rel (0) target = $region9
    $region8: #{tpu_custom_call.1} parent=1 // pred_region
      _
    $region9: #{tpu_custom_call.1} parent=1 // pred_fallthru
      _
    // Predicated region
    $region10: #{tpu_custom_call.1} parent=1 // pred_check
      _
    $region11: #{tpu_custom_call.1} parent=1 // pred_check_branch
      %20 = sbr.rel (0) target = $region13
    $region12: #{tpu_custom_call.1} parent=1 // pred_region
      _
    $region13: #{tpu_custom_call.1} parent=1 // pred_fallthru
      _
    // Predicated region
    $region14: #{tpu_custom_call.1} parent=1 // pred_check
      _
    $region15: #{tpu_custom_call.1} parent=1 // pred_check_branch
      %22 = sbr.rel (0) target = $region17
    $region16: #{tpu_custom_call.1} parent=1 // pred_region
      _
    $region17: #{tpu_custom_call.1} parent=1 // pred_fallthru
      _
    // Predicated region
    $region18: #{tpu_custom_call.1} parent=1 // pred_check
      _
    $region19: #{tpu_custom_call.1} parent=1 // pred_check_branch
      %24 = sbr.rel (0) target = $region21
    $region20: #{tpu_custom_call.1} parent=1 // pred_region
      _
    $region21: #{tpu_custom_call.1} parent=1 // pred_fallthru
      _
    // Predicated region
    $region22: #{tpu_custom_call.1} parent=1 // pred_check
      _
    $region23: #{tpu_custom_call.1} parent=1 // pred_check_branch
      %26 = sbr.rel (0) target = $region25
    $region24: #{tpu_custom_call.1} parent=1 // pred_region
      _
    $region25: #{tpu_custom_call.1} parent=1 // pred_fallthru
      _
    // Predicated region
    $region26: #{tpu_custom_call.1} parent=1 // pred_check
      _
    $region27: #{tpu_custom_call.1} parent=1 // pred_check_branch
      %28 = sbr.rel (0) target = $region29
    $region28: #{tpu_custom_call.1} parent=1 // pred_region
      _
    $region29: #{tpu_custom_call.1} parent=1 // pred_fallthru
      _
    %v30 = vld [vmem:[%s0] sm:$0xff]
    %v31 = vld [vmem:[%s0 + $0x8] sm:$0xff]
    %v32 = vld [vmem:[%s0 + $0x10] sm:$0xff]
    %v33 = vld [vmem:[%s0 + $0x18] sm:$0xff]
    %v34 = vpack.c.bf16 %v30, %v30
    %v35 = vpack.c.bf16 %v31, %v31
    %v36 = vpack.c.bf16 %v32, %v32
    %v37 = vpack.c.bf16 %v33, %v33
    %v38 = vld [vmem:[%s1] sm:$0xf]
    %v39 = vld [vmem:[%s1 + $0x4] sm:$0xf]
    %v40 = vld [vmem:[%s1 + $0x8] sm:$0xf]
    %v41 = vld [vmem:[%s1 + $0xc] sm:$0xf]
    %v42 = vld [vmem:[%s1 + $0x10] sm:$0xf]
    %v43 = vld [vmem:[%s1 + $0x14] sm:$0xf]
    %v44 = vld [vmem:[%s1 + $0x18] sm:$0xf]
    %v45 = vld [vmem:[%s1 + $0x1c] sm:$0xf]
    %v46 = vld [vmem:[%s1 + $0x20] sm:$0xf]
    %v47 = vld [vmem:[%s1 + $0x24] sm:$0xf]
    %v48 = vld [vmem:[%s1 + $0x28] sm:$0xf]
    %v49 = vld [vmem:[%s1 + $0x2c] sm:$0xf]
    %v50 = vld [vmem:[%s1 + $0x30] sm:$0xf]
    %v51 = vld [vmem:[%s1 + $0x34] sm:$0xf]
    %v52 = vld [vmem:[%s1 + $0x38] sm:$0xf]
    %v53 = vld [vmem:[%s1 + $0x3c] sm:$0xf]
    %v54 = vld [vmem:[%s1 + $0x40] sm:$0xf]
    %v55 = vld [vmem:[%s1 + $0x44] sm:$0xf]
    %v56 = vld [vmem:[%s1 + $0x48] sm:$0xf]
    %v57 = vld [vmem:[%s1 + $0x4c] sm:$0xf]
    %v58 = vld [vmem:[%s1 + $0x50] sm:$0xf]
    %v59 = vld [vmem:[%s1 + $0x54] sm:$0xf]
    %v60 = vld [vmem:[%s1 + $0x58] sm:$0xf]
    %v61 = vld [vmem:[%s1 + $0x5c] sm:$0xf]
    %v62 = vld [vmem:[%s1 + $0x60] sm:$0xf]
    %v63 = vld [vmem:[%s1 + $0x64] sm:$0xf]
    %v64 = vld [vmem:[%s1 + $0x68] sm:$0xf]
    %v65 = vld [vmem:[%s1 + $0x6c] sm:$0xf]
    %v66 = vld [vmem:[%s1 + $0x70] sm:$0xf]
    %v67 = vld [vmem:[%s1 + $0x74] sm:$0xf]
    %v68 = vld [vmem:[%s1 + $0x78] sm:$0xf]
    %v69 = vld [vmem:[%s1 + $0x7c] sm:$0xf]
    %v70 = vld [vmem:[%s1 + $0x80] sm:$0xf]
    %v71 = vld [vmem:[%s1 + $0x84] sm:$0xf]
    %v72 = vld [vmem:[%s1 + $0x88] sm:$0xf]
    %v73 = vld [vmem:[%s1 + $0x8c] sm:$0xf]
    %v74 = vld [vmem:[%s1 + $0x90] sm:$0xf]
    %v75 = vld [vmem:[%s1 + $0x94] sm:$0xf]
    %v76 = vld [vmem:[%s1 + $0x98] sm:$0xf]
    %v77 = vld [vmem:[%s1 + $0x9c] sm:$0xf]
    %v78 = vld [vmem:[%s1 + $0xa0] sm:$0xf]
    %v79 = vld [vmem:[%s1 + $0xa4] sm:$0xf]
    %v80 = vld [vmem:[%s1 + $0xa8] sm:$0xf]
    %v81 = vld [vmem:[%s1 + $0xac] sm:$0xf]
    %v82 = vld [vmem:[%s1 + $0xb0] sm:$0xf]
    %v83 = vld [vmem:[%s1 + $0xb4] sm:$0xf]
    %v84 = vld [vmem:[%s1 + $0xb8] sm:$0xf]
    %v85 = vld [vmem:[%s1 + $0xbc] sm:$0xf]
    %v86 = vld [vmem:[%s1 + $0xc0] sm:$0xf]
    %v87 = vld [vmem:[%s2] sm:$0x1]
    %v89 = vlaneseq
    %v90 = vshrl.u32 %v89, 7
    %v91 = vsub.s32 0, %v90
    %v92 = vrot.slane %v87, %v91
    %v143 = vunpack.c.l.b16 %v38
    %v144 = vunpack.c.l.b16 %v39
    %v145 = vunpack.c.l.b16 %v40
    %v146 = vunpack.c.l.b16 %v41
    %v147 = vunpack.c.l.b16 %v42
    %v148 = vunpack.c.l.b16 %v43
    %v149 = vunpack.c.l.b16 %v44
    %v150 = vunpack.c.l.b16 %v45
    %v151 = vunpack.c.l.b16 %v46
    %v152 = vunpack.c.l.b16 %v47
    %v153 = vunpack.c.l.b16 %v48
    %v154 = vunpack.c.l.b16 %v49
    %v155 = vunpack.c.l.b16 %v50
    %v156 = vunpack.c.l.b16 %v51
    %v157 = vunpack.c.l.b16 %v52
    %v158 = vunpack.c.l.b16 %v53
    %v159 = vunpack.c.l.b16 %v54
    %v160 = vunpack.c.l.b16 %v55
    %v161 = vunpack.c.l.b16 %v56
    %v162 = vunpack.c.l.b16 %v57
    %v163 = vunpack.c.l.b16 %v58
    %v164 = vunpack.c.l.b16 %v59
    %v165 = vunpack.c.l.b16 %v60
    %v166 = vunpack.c.l.b16 %v61
    %v167 = vunpack.c.l.b16 %v62
    %v168 = vunpack.c.l.b16 %v63
    %v169 = vunpack.c.l.b16 %v64
    %v170 = vunpack.c.l.b16 %v65
    %v171 = vunpack.c.l.b16 %v66
    %v172 = vunpack.c.l.b16 %v67
    %v173 = vunpack.c.l.b16 %v68
    %v174 = vunpack.c.l.b16 %v69
    %v175 = vunpack.c.l.b16 %v70
    %v176 = vunpack.c.l.b16 %v71
    %v177 = vunpack.c.l.b16 %v72
    %v178 = vunpack.c.l.b16 %v73
    %v179 = vunpack.c.l.b16 %v74
    %v180 = vunpack.c.l.b16 %v75
    %v181 = vunpack.c.l.b16 %v76
    %v182 = vunpack.c.l.b16 %v77
    %v183 = vunpack.c.l.b16 %v78
    %v184 = vunpack.c.l.b16 %v79
    %v185 = vunpack.c.l.b16 %v80
    %v186 = vunpack.c.l.b16 %v81
    %v187 = vunpack.c.l.b16 %v82
    %v188 = vunpack.c.l.b16 %v83
    %v189 = vunpack.c.l.b16 %v84
    %v190 = vunpack.c.l.b16 %v85
    %v191 = vunpack.c.l.b16 %v86
    %v192 = vpack.c.b16 %v144, %v143
    %v193 = vpack.c.b16 %v146, %v145
    %v194 = vpack.c.b16 %v148, %v147
    %v195 = vpack.c.b16 %v150, %v149
    %v196 = vpack.c.b16 %v152, %v151
    %v197 = vpack.c.b16 %v154, %v153
    %v198 = vpack.c.b16 %v156, %v155
    %v199 = vpack.c.b16 %v158, %v157
    %v200 = vpack.c.b16 %v160, %v159
    %v201 = vpack.c.b16 %v162, %v161
    %v202 = vpack.c.b16 %v164, %v163
    %v203 = vpack.c.b16 %v166, %v165
    %v204 = vpack.c.b16 %v168, %v167
    %v205 = vpack.c.b16 %v170, %v169
    %v206 = vpack.c.b16 %v172, %v171
    %v207 = vpack.c.b16 %v174, %v173
    %v208 = vpack.c.b16 %v176, %v175
    %v209 = vpack.c.b16 %v178, %v177
    %v210 = vpack.c.b16 %v180, %v179
    %v211 = vpack.c.b16 %v182, %v181
    %v212 = vpack.c.b16 %v184, %v183
    %v213 = vpack.c.b16 %v186, %v185
    %v214 = vpack.c.b16 %v188, %v187
    %v215 = vpack.c.b16 %v190, %v189
    %v216 = vpack.c.b16 %v191, %v191
    %vm241 = vcmask 56320
    %v243 = vsel %vm241, %v37, 0
    %vm245 = vcmask 1042432
    %vm246 = vcmask 1043456
    %v247 = vsel %vm245, 4294967295, 65535
    %v248 = vsel %vm246, %v247, 0
    %v250 = vand.u32 %v216, %v248
    %252 = vmatprep.subr.bf16.mxu0 0
    %253 = vmatpush1.bf16.msra.mxu0 %v192
    %254 = vmatprep.subr.bf16.mxu0 0
    %255 = vmatpush1.bf16.msra.mxu0 %v193
    %256 = vmatprep.subr.bf16.mxu0 0
    %257 = vmatpush1.bf16.msra.mxu0 %v194
    %258 = vmatprep.subr.bf16.mxu0 0
    %259 = vmatpush1.bf16.msra.mxu0 %v195
    %260 = vmatprep.subr.bf16.mxu0 0
    %261 = vmatpush1.bf16.msra.mxu0 %v196
    %262 = vmatprep.subr.bf16.mxu0 0
    %263 = vmatpush1.bf16.msra.mxu0 %v197
    %264 = vmatprep.subr.bf16.mxu0 0
    %265 = vmatpush1.bf16.msra.mxu0 %v198
    %266 = vmatprep.subr.bf16.mxu0 0
    %267 = vmatpush1.bf16.msra.mxu0 %v199
    %268 = vmatprep.subr.bf16.mxu0 0
    %269 = vmatpush1.bf16.msra.mxu0 %v200
    %270 = vmatprep.subr.bf16.mxu0 0
    %271 = vmatpush1.bf16.msra.mxu0 %v201
    %272 = vmatprep.subr.bf16.mxu0 0
    %273 = vmatpush1.bf16.msra.mxu0 %v202
    %274 = vmatprep.subr.bf16.mxu0 0
    %275 = vmatpush1.bf16.msra.mxu0 %v203
    %276 = vmatprep.subr.bf16.mxu0 0
    %277 = vmatpush1.bf16.msra.mxu0 %v204
    %278 = vmatprep.subr.bf16.mxu0 0
    %279 = vmatpush1.bf16.msra.mxu0 %v205
    %280 = vmatprep.subr.bf16.mxu0 0
    %281 = vmatpush1.bf16.msra.mxu0 %v206
    %282 = vmatprep.subr.bf16.mxu0 0
    %283 = vmatpush1.bf16.msra.mxu0 %v207
    %284 = vmatprep.mubr.bf16.mxu0 %v35
    %285 = vmatmul.mubr.bf16.gmra.mrb[0].mxu0 %v34
    %v286 = vpop.f32.mrb[0].mxu0
    %v287 = vadd.f32 %v92, %v286
    %v288 = vpop.f32.mrb[0].mxu0
    %v289 = vpop.f32.mrb[0].mxu0
    %v290 = vpop.f32.mrb[0].mxu0
    %291 = vdwg.mxu0
    %292 = vmatprep.subr.bf16.mxu0 0
    %293 = vmatpush1.bf16.msra.mxu0 %v208
    %294 = vmatprep.subr.bf16.mxu0 0
    %295 = vmatpush1.bf16.msra.mxu0 %v209
    %296 = vmatprep.subr.bf16.mxu0 0
    %297 = vmatpush1.bf16.msra.mxu0 %v210
    %298 = vmatprep.subr.bf16.mxu0 0
    %299 = vmatpush1.bf16.msra.mxu0 %v211
    %300 = vmatprep.subr.bf16.mxu0 0
    %301 = vmatpush1.bf16.msra.mxu0 %v212
    %302 = vmatprep.subr.bf16.mxu0 0
    %303 = vmatpush1.bf16.msra.mxu0 %v213
    %304 = vmatprep.subr.bf16.mxu0 0
    %305 = vmatpush1.bf16.msra.mxu0 %v214
    %306 = vmatprep.subr.bf16.mxu0 0
    %307 = vmatpush1.bf16.msra.mxu0 %v215
    %308 = vmatprep.subr.bf16.mxu0 0
    %309 = vmatpush1.bf16.msra.mxu0 %v250
    %310 = vmatprep.subr.bf16.mxu0 0
    %311 = vmatpush1.bf16.msra.mxu0 0
    %312 = vmatprep.subr.bf16.mxu0 0
    %313 = vmatpush1.bf16.msra.mxu0 0
    %314 = vmatprep.subr.bf16.mxu0 0
    %315 = vmatpush1.bf16.msra.mxu0 0
    %316 = vmatprep.subr.bf16.mxu0 0
    %317 = vmatpush1.bf16.msra.mxu0 0
    %318 = vmatprep.subr.bf16.mxu0 0
    %319 = vmatpush1.bf16.msra.mxu0 0
    %320 = vmatprep.subr.bf16.mxu0 0
    %321 = vmatpush1.bf16.msra.mxu0 0
    %322 = vmatprep.subr.bf16.mxu0 0
    %323 = vmatpush1.bf16.msra.mxu0 0
    %324 = vmatprep.mubr.bf16.mxu0 %v243
    %325 = vmatmul.mubr.bf16.gmra.mrb[0].mxu0 %v36
    %v326 = vpop.f32.mrb[0].mxu0
    %v327 = vadd.f32 %v287, %v326
    %v328 = vpop.f32.mrb[0].mxu0
    %v329 = vpop.f32.mrb[0].mxu0
    %v330 = vpop.f32.mrb[0].mxu0
    %331 = vdwg.mxu0
    %v332 = vmax.f32 %v327, 0.0
    %v333 = vld [vmem:[%s3] sm:$0xff]
    %v334 = vld [vmem:[%s3 + $0x8] sm:$0xff]
    %v335 = vld [vmem:[%s3 + $0x10] sm:$0xff]
    %v336 = vld [vmem:[%s3 + $0x18] sm:$0xff]
    %v337 = vld [vmem:[%s4] sm:$0x1]
    %v339 = vlaneseq
    %v340 = vshrl.u32 %v339, 7
    %v341 = vsub.s32 0, %v340
    %v342 = vrot.slane %v337, %v341
    %vm344 = vcmask 261120
    %v346 = vsel %vm344, %v332, 0
    %348 = vmatprep.subr.mxu0 0.0
    %349 = vmatpush1.msra.mxu0 %v333
    %350 = vmatprep.subr.mxu0 0.0
    %351 = vmatpush1.msra.mxu0 %v334
    %352 = vmatprep.subr.mxu0 0.0
    %353 = vmatpush1.msra.mxu0 %v335
    %354 = vmatprep.subr.mxu0 0.0
    %355 = vmatpush1.msra.mxu0 %v336
    %356 = vmatprep.subr.mxu0 0.0
    %357 = vmatpush1.msra.mxu0 0.0
    %358 = vmatprep.subr.mxu0 0.0
    %359 = vmatpush1.msra.mxu0 0.0
    %360 = vmatprep.subr.mxu0 0.0
    %361 = vmatpush1.msra.mxu0 0.0
    %362 = vmatprep.subr.mxu0 0.0
    %363 = vmatpush1.msra.mxu0 0.0
    %364 = vmatprep.subr.mxu0 0.0
    %365 = vmatpush1.msra.mxu0 0.0
    %366 = vmatprep.subr.mxu0 0.0
    %367 = vmatpush1.msra.mxu0 0.0
    %368 = vmatprep.subr.mxu0 0.0
    %369 = vmatpush1.msra.mxu0 0.0
    %370 = vmatprep.subr.mxu0 0.0
    %371 = vmatpush1.msra.mxu0 0.0
    %372 = vmatprep.subr.mxu0 0.0
    %373 = vmatpush1.msra.mxu0 0.0
    %374 = vmatprep.subr.mxu0 0.0
    %375 = vmatpush1.msra.mxu0 0.0
    %376 = vmatprep.subr.mxu0 0.0
    %377 = vmatpush1.msra.mxu0 0.0
    %378 = vmatprep.subr.mxu0 0.0
    %379 = vmatpush1.msra.mxu0 0.0
    %380 = vmatprep.subr.mxu0 0.0
    %381 = vmatpush1.msra.mxu0 0.0
    %382 = vmatprep.subr.mxu0 0.0
    %383 = vmatpush1.msra.mxu0 0.0
    %384 = vmatprep.subr.mxu0 0.0
    %385 = vmatpush1.msra.mxu0 0.0
    %386 = vmatprep.subr.mxu0 0.0
    %387 = vmatpush1.msra.mxu0 0.0
    %388 = vmatprep.subr.mxu0 0.0
    %389 = vmatpush1.msra.mxu0 0.0
    %390 = vmatprep.subr.mxu0 0.0
    %391 = vmatpush1.msra.mxu0 0.0
    %392 = vmatprep.subr.mxu0 0.0
    %393 = vmatpush1.msra.mxu0 0.0
    %394 = vmatprep.subr.mxu0 0.0
    %395 = vmatpush1.msra.mxu0 0.0
    %396 = vmatprep.subr.mxu0 0.0
    %397 = vmatpush1.msra.mxu0 0.0
    %398 = vmatprep.subr.mxu0 0.0
    %399 = vmatpush1.msra.mxu0 0.0
    %400 = vmatprep.subr.mxu0 0.0
    %401 = vmatpush1.msra.mxu0 0.0
    %402 = vmatprep.subr.mxu0 0.0
    %403 = vmatpush1.msra.mxu0 0.0
    %404 = vmatprep.subr.mxu0 0.0
    %405 = vmatpush1.msra.mxu0 0.0
    %406 = vmatprep.subr.mxu0 0.0
    %407 = vmatpush1.msra.mxu0 0.0
    %408 = vmatprep.subr.mxu0 0.0
    %409 = vmatpush1.msra.mxu0 0.0
    %410 = vmatprep.subr.mxu0 0.0
    %411 = vmatpush1.msra.mxu0 0.0
    %412 = vmatprep.mubr.f32.mxu0 0.0
    %413 = vmatmul.mubr.f32.gmra.mrb[0].mxu0 %v346
    %v414 = vpop.f32.mrb[0].mxu0
    %v415 = vadd.f32 %v342, %v414
    %v416 = vpop.f32.mrb[0].mxu0
    %417 = vdwg.mxu0
    %v418 = vmax.f32 %v415, 0.0
    %v419 = vld [vmem:[%s5] sm:$0x1]
    %v420 = vld [vmem:[#allocation2] sm:$0x1]
    %422 = vset.pattern.permute.xlu0 0
    %423 = vperm.xlu0 %422, %v420
    %v424 = vpop.permute.xlu0 %423
    %v426 = vlaneseq
    %v427 = vshrl.u32 %v426, 7
    %v428 = vsub.s32 0, %v427
    %v429 = vrot.slane %v424, %v428
    %v431 = vsel %vm344, %v419, 0
    %v434 = vsel %vm344, %v418, 0
    %436 = vmatprep.subr.mxu0 0.0
    %437 = vmatpush1.xpose.msra.mxu0 %v434
    %438 = vmatprep.subr.mxu0 0.0
    %439 = vmatpush1.xpose.msra.mxu0 0.0
    %440 = vmatprep.subr.mxu0 0.0
    %441 = vmatpush1.xpose.msra.mxu0 0.0
    %442 = vmatprep.subr.mxu0 0.0
    %443 = vmatpush1.xpose.msra.mxu0 0.0
    %444 = vmatprep.subr.mxu0 0.0
    %445 = vmatpush1.xpose.msra.mxu0 0.0
    %446 = vmatprep.subr.mxu0 0.0
    %447 = vmatpush1.xpose.msra.mxu0 0.0
    %448 = vmatprep.subr.mxu0 0.0
    %449 = vmatpush1.xpose.msra.mxu0 0.0
    %450 = vmatprep.subr.mxu0 0.0
    %451 = vmatpush1.xpose.msra.mxu0 0.0
    %452 = vmatprep.subr.mxu0 0.0
    %453 = vmatpush1.xpose.msra.mxu0 0.0
    %454 = vmatprep.subr.mxu0 0.0
    %455 = vmatpush1.xpose.msra.mxu0 0.0
    %456 = vmatprep.subr.mxu0 0.0
    %457 = vmatpush1.xpose.msra.mxu0 0.0
    %458 = vmatprep.subr.mxu0 0.0
    %459 = vmatpush1.xpose.msra.mxu0 0.0
    %460 = vmatprep.subr.mxu0 0.0
    %461 = vmatpush1.xpose.msra.mxu0 0.0
    %462 = vmatprep.subr.mxu0 0.0
    %463 = vmatpush1.xpose.msra.mxu0 0.0
    %464 = vmatprep.subr.mxu0 0.0
    %465 = vmatpush1.xpose.msra.mxu0 0.0
    %466 = vmatprep.subr.mxu0 0.0
    %467 = vmatpush1.xpose.msra.mxu0 0.0
    %468 = vmatprep.subr.mxu0 0.0
    %469 = vmatpush1.xpose.msra.mxu0 0.0
    %470 = vmatprep.subr.mxu0 0.0
    %471 = vmatpush1.xpose.msra.mxu0 0.0
    %472 = vmatprep.subr.mxu0 0.0
    %473 = vmatpush1.xpose.msra.mxu0 0.0
    %474 = vmatprep.subr.mxu0 0.0
    %475 = vmatpush1.xpose.msra.mxu0 0.0
    %476 = vmatprep.subr.mxu0 0.0
    %477 = vmatpush1.xpose.msra.mxu0 0.0
    %478 = vmatprep.subr.mxu0 0.0
    %479 = vmatpush1.xpose.msra.mxu0 0.0
    %480 = vmatprep.subr.mxu0 0.0
    %481 = vmatpush1.xpose.msra.mxu0 0.0
    %482 = vmatprep.subr.mxu0 0.0
    %483 = vmatpush1.xpose.msra.mxu0 0.0
    %484 = vmatprep.subr.mxu0 0.0
    %485 = vmatpush1.xpose.msra.mxu0 0.0
    %486 = vmatprep.subr.mxu0 0.0
    %487 = vmatpush1.xpose.msra.mxu0 0.0
    %488 = vmatprep.subr.mxu0 0.0
    %489 = vmatpush1.xpose.msra.mxu0 0.0
    %490 = vmatprep.subr.mxu0 0.0
    %491 = vmatpush1.xpose.msra.mxu0 0.0
    %492 = vmatprep.subr.mxu0 0.0
    %493 = vmatpush1.xpose.msra.mxu0 0.0
    %494 = vmatprep.subr.mxu0 0.0
    %495 = vmatpush1.xpose.msra.mxu0 0.0
    %496 = vmatprep.subr.mxu0 0.0
    %497 = vmatpush1.xpose.msra.mxu0 0.0
    %498 = vmatprep.subr.mxu0 0.0
    %499 = vmatpush1.xpose.msra.mxu0 0.0
    %500 = vmatprep.mubr.f32.mxu0 0.0
    %501 = vmatmul.mubr.f32.gmra.mrb[0].mxu0 %v431
    %v502 = vpop.f32.mrb[0].mxu0
    %v503 = vadd.f32 %v429, %v502
    %v504 = vpop.f32.mrb[0].mxu0
    %505 = vdwg.mxu0
    %vm506 = vcmask 57344
    %507 = vst.msk [vmem:[#allocation3] sm:$0x1] %vm506, %v503
    // Predicated region
    $region30: #{tpu_custom_call.1} parent=1 // pred_check
      _
    $region31: #{tpu_custom_call.1} parent=1 // pred_check_branch
      %509 = sbr.rel (0) target = $region33
    $region32: #{tpu_custom_call.1} parent=1 // pred_region
      %s511 = ssub.s32 16, 16
      %512 = vsyncadd [#allocation4], %s511
      %s514 = sshll.u32 [#allocation3], 4
      %s515 = int_to_ptr.vmem [resolvable:$true] %s514
      %517 = dma.vmem_to_hbm [thread:$0]  %s515, 16, %s7, [#allocation4]
    $region33: #{tpu_custom_call.1} parent=1 // pred_fallthru
      _
    // Predicated region
    $region34: #{tpu_custom_call.1} parent=1 // pred_check
      _
    $region35: #{tpu_custom_call.1} parent=1 // pred_check_branch
      %519 = sbr.rel (0) target = $region37
    $region36: #{tpu_custom_call.1} parent=1 // pred_region
      %520 = dma.done [#allocation4], 16
    $region37: #{tpu_custom_call.1} parent=1 // pred_fallthru
      _
    %521 = vsyncpa [#allocation4], 1

</llo_original>
